<compile_context>
chip_gen: v5e
topology: v5e:2x2
jax: 0.10.0
libtpu: 0.0.40
codegen_flags: <defaults>
</compile_context>

<pallas_src>
import math

import jax
import jax.numpy as jnp
from jax.experimental import pallas as pl
from jax.experimental.pallas import tpu as pltpu

MASK_VALUE = -1e15
LN_EPS = 1e-5


# ---------------------------------------------------------------------------
# small helpers
# ---------------------------------------------------------------------------
def _round_up(x, m):
    return ((x + m - 1) // m) * m


def _pick_q_tile(T):
    if T >= 128:
        return 128                      # MXU-friendly on every generation
    return max(8, _round_up(T, 8))      # tiny sequences: one sublane-aligned tile


def _layer_norm(v, gamma, beta):
    # single reduction sweep; clamp variance (ms - mu^2 can cancel negative)
    mu = jnp.mean(v, axis=-1, keepdims=True)
    ms = jnp.mean(v * v, axis=-1, keepdims=True)
    var = jnp.maximum(ms - mu * mu, 0.0)
    return (v - mu) * jax.lax.rsqrt(var + LN_EPS) * gamma + beta


# ---------------------------------------------------------------------------
# pl.Buffered(1) feature probe (single-buffer the constant weight blocks)
# ---------------------------------------------------------------------------
def _probe_copy_kernel(x_ref, o_ref):
    o_ref[...] = x_ref[...]


_BUFFERED1_OK = None


def _buffered1_ok():
    global _BUFFERED1_OK
    if _BUFFERED1_OK is None:
        try:
            spec = pl.BlockSpec((8, 128), lambda i: (0, 0),
                                pipeline_mode=pl.Buffered(1))
            fn = pl.pallas_call(
                _probe_copy_kernel,
                out_shape=jax.ShapeDtypeStruct((8, 128), jnp.float32),
                grid=(1,),
                in_specs=[spec],
                out_specs=pl.BlockSpec((8, 128), lambda i: (0, 0)))
            jax.block_until_ready(fn(jnp.zeros((8, 128), jnp.float32)))
            _BUFFERED1_OK = True
        except Exception:
            _BUFFERED1_OK = False
    return _BUFFERED1_OK


def _const_spec(shape, buffered1):
    index_map = lambda *args: (0,) * len(shape)
    if buffered1:
        return pl.BlockSpec(shape, index_map, pipeline_mode=pl.Buffered(1))
    return pl.BlockSpec(shape, index_map)


# ---------------------------------------------------------------------------
# VMEM budgeting
# ---------------------------------------------------------------------------
def _vmem_budget():
    cap = None
    try:
        cap = int(pltpu.get_tpu_info().vmem_capacity_bytes)
    except Exception:
        cap = None
    if not cap:
        cap = 64 << 20                      # conservative: v7x per-core VMEM
    # leave headroom for Mosaic internal scratch / semaphores / DMA descriptors
    return min(cap - (8 << 20), int(cap * 0.875))


def _attn_vmem_estimate(T_pad, D, F, H, tq, band, buffered1):
    wbuf = 1 if buffered1 else 2
    weights = wbuf * 2 * (D * D + 2 * D * F)          # wo, w1, w2 (bf16)
    biases = wbuf * 4 * (4 * D + F)                   # bo, b1, b2, ln2 (f32)
    kv = 8 * T_pad * D                                # k + v bf16, 2 buffers each
    tiles = 8 * tq * D + 4 * tq * D                   # x,q in (2 buf) + out (2 buf)
    scores = 3 * 4 * H * tq * band                    # scores + exp + masked (f32)
    acts = 4 * tq * (4 * D + F) + 2 * tq * F          # ctx/attn/y2/ff f32, hid bf16
    heads = 2 * (tq + 2 * band) * D                   # bf16 head relayouts
    return weights + biases + kv + tiles + scores + acts + heads


# ---------------------------------------------------------------------------
# Pallas kernels
# ---------------------------------------------------------------------------
def _prenet_kernel(x_ref, w_ref, b_ref, o_ref):
    # x_ref: (1, T, K*F) bf16   w_ref: (K*F, D) bf16   b_ref: (1, D) f32
    o_ref[0] = (jnp.dot(x_ref[0], w_ref[...],
                        preferred_element_type=jnp.float32)
                + b_ref[...]).astype(o_ref.dtype)


def _qkv_kernel(x_ref, ln_g, ln_b, wq, bq, wk, bk, wv, bv,
                q_ref, k_ref, v_ref):
    # per (batch, T-tile): LN1 then the three projections (wq/bq pre-scaled
    # by 1/d_model at parameter-prep time).
    x = x_ref[0].astype(jnp.float32)                  # (tq, D)
    y = _layer_norm(x, ln_g[...], ln_b[...])
    y16 = y.astype(jnp.bfloat16)
    q = jnp.dot(y16, wq[...], preferred_element_type=jnp.float32) + bq[...]
    k = jnp.dot(y16, wk[...], preferred_element_type=jnp.float32) + bk[...]
    v = jnp.dot(y16, wv[...], preferred_element_type=jnp.float32) + bv[...]
    q_ref[0] = q.astype(q_ref.dtype)
    k_ref[0] = k.astype(k_ref.dtype)
    v_ref[0] = v.astype(v_ref.dtype)


def _make_attn_ffn_kernel(n_heads, left_size, right_size, tq, band, T_pad):
    left8 = _round_up(left_size, 8)       # keeps the band start 8-aligned

    def kernel(len_ref, x_ref, q_ref, k_ref, v_ref,
               wo, bo, w1, b1, w2, b2, ln2_g, ln2_b, o_ref):
        b = pl.program_id(0)
        qi = pl.program_id(1)
        D = x_ref.shape[2]
        H = n_heads
        dk = D // H
        length = len_ref[b]
        q0 = qi * tq

        # ---- fixed-width, 8-aligned key/value band -------------------------
        s0 = jnp.clip(q0 - left8, 0, T_pad - band)
        s0 = pl.multiple_of(s0, 8)
        kb = k_ref[0, pl.ds(s0, band), :]                 # (band, D) bf16
        vb = v_ref[0, pl.ds(s0, band), :]                 # (band, D) bf16

        x = x_ref[0].astype(jnp.float32)                  # residual (tq, D)
        q = q_ref[0]                                      # (tq, D) bf16 (pre-scaled)

        # single relayout per tensor; K pre-transposed to (H, dk, band)
        qh = q.reshape(tq, H, dk).transpose(1, 0, 2)      # (H, tq, dk)
        kh = kb.reshape(band, H, dk).transpose(1, 2, 0)   # (H, dk, band)
        vh = vb.reshape(band, H, dk).transpose(1, 0, 2)   # (H, band, dk)

        s = jnp.einsum('hqd,hdk->hqk', qh, kh,
                       preferred_element_type=jnp.float32)  # (H, tq, band)

        qpos = q0 + jax.lax.broadcasted_iota(jnp.int32, (tq, band), 0)
        kpos = s0 + jax.lax.broadcasted_iota(jnp.int32, (tq, band), 1)
        allowed = ((qpos < length) & (kpos < length)
                   & (kpos >= qpos - left_size) & (kpos <= qpos + right_size))
        s = jnp.where(allowed[None, :, :], s, MASK_VALUE)

        # softmax: exp + approximate reciprocal (EUP slot) instead of a divide
        m = jnp.max(s, axis=-1, keepdims=True)
        e = jnp.exp(s - m)
        denom = jnp.sum(e, axis=-1, keepdims=True)
        p = (e * pl.reciprocal(denom, approx=True)).astype(jnp.bfloat16)

        ctx = jnp.einsum('hqk,hkd->hqd', p, vh,
                         preferred_element_type=jnp.float32)  # (H, tq, dk)
        ctx = ctx.transpose(1, 0, 2).reshape(tq, D)           # lane-dense (tq, D)

        attn = jnp.dot(ctx.astype(jnp.bfloat16), wo[...],
                       preferred_element_type=jnp.float32) + bo[...]

        # ---- residual + FFN + add & norm (all on the tq tile) ---------------
        y2 = attn + x
        y2_16 = y2.astype(jnp.bfloat16)
        hid = jnp.dot(y2_16, w1[...],
                      preferred_element_type=jnp.float32) + b1[...]
        hid = jnp.maximum(hid, 0.0).astype(jnp.bfloat16)
        ff = jnp.dot(hid, w2[...],
                     preferred_element_type=jnp.float32) + b2[...]

        o_ref[0] = _layer_norm(ff + y2, ln2_g[...], ln2_b[...]).astype(o_ref.dtype)

    return kernel


# ---------------------------------------------------------------------------
# pallas_call wrappers
# ---------------------------------------------------------------------------
def prenet_forward(x_patches, w, b):
    B, T_out, KF = x_patches.shape
    D = w.shape[1]
    return pl.pallas_call(
        _prenet_kernel,
        out_shape=jax.ShapeDtypeStruct((B, T_out, D), jnp.bfloat16),
        grid=(B,),
        in_specs=[
            pl.BlockSpec((1, T_out, KF), lambda i: (i, 0, 0)),
            pl.BlockSpec((KF, D), lambda i: (0, 0)),
            pl.BlockSpec((1, D), lambda i: (0, 0)),
        ],
        out_specs=pl.BlockSpec((1, T_out, D), lambda i: (i, 0, 0)),
        compiler_params=pltpu.CompilerParams(dimension_semantics=("parallel",)),
    )(x_patches, w, b)


def qkv_forward(x, p, tq, buffered1):
    B, T_pad, D = x.shape
    nq = T_pad // tq
    tile = pl.BlockSpec((1, tq, D), lambda b, qi: (b, qi, 0))
    wD = _const_spec((D, D), buffered1)
    bD = _const_spec((1, D), buffered1)
    out_sd = jax.ShapeDtypeStruct((B, T_pad, D), jnp.bfloat16)
    out_spec = pl.BlockSpec((1, tq, D), lambda b, qi: (b, qi, 0))
    return pl.pallas_call(
        _qkv_kernel,
        out_shape=(out_sd, out_sd, out_sd),
        grid=(B, nq),
        in_specs=[tile, bD, bD, wD, bD, wD, bD, wD, bD],
        out_specs=(out_spec, out_spec, out_spec),
        compiler_params=pltpu.CompilerParams(
            dimension_semantics=("parallel", "parallel")),
    )(x, p["ln1_g"], p["ln1_b"],
      p["wq"], p["bq"], p["wk"], p["bk"], p["wv"], p["bv"])


def attn_ffn_forward(x, q, k, v, lengths, p, n_heads, left_size, right_size,
                     tq, band, buffered1):
    B, T_pad, D = x.shape
    F = p["w1"].shape[1]
    nq = T_pad // tq
    kernel = _make_attn_ffn_kernel(n_heads, left_size, right_size, tq, band, T_pad)

    tile = pl.BlockSpec((1, tq, D), lambda b, qi, lens: (b, qi, 0))
    seq = pl.BlockSpec((1, T_pad, D), lambda b, qi, lens: (b, 0, 0))
    in_specs = [
        tile,                                                        # x (residual)
        tile,                                                        # q
        seq, seq,                                                    # k, v
        _const_spec((D, D), buffered1), _const_spec((1, D), buffered1),  # wo, bo
        _const_spec((D, F), buffered1), _const_spec((1, F), buffered1),  # w1, b1
        _const_spec((F, D), buffered1), _const_spec((1, D), buffered1),  # w2, b2
        _const_spec((1, D), buffered1), _const_spec((1, D), buffered1),  # ln2 g/b
    ]

    est = _attn_vmem_estimate(T_pad, D, F, n_heads, tq, band, buffered1)
    vmem_limit = None
    if est > (16 << 20):
        budget = _vmem_budget()
        if est > budget:
            raise ValueError(
                f"attention tile working set (~{est >> 20} MiB) exceeds the VMEM "
                f"budget (~{budget >> 20} MiB); reduce tq or the attention window")
        vmem_limit = min(int(est * 1.25), budget)

    return pl.pallas_call(
        kernel,
        out_shape=jax.ShapeDtypeStruct((B, T_pad, D), jnp.bfloat16),
        grid_spec=pltpu.PrefetchScalarGridSpec(
            num_scalar_prefetch=1,                    # lengths -> SMEM
            grid=(B, nq),
            in_specs=in_specs,
            out_specs=pl.BlockSpec((1, tq, D), lambda b, qi, lens: (b, qi, 0)),
        ),
        compiler_params=pltpu.CompilerParams(
            dimension_semantics=("parallel", "parallel"),
            vmem_limit_bytes=vmem_limit),
    )(lengths, x, q, k, v,
      p["wo"], p["bo"], p["w1"], p["b1"], p["w2"], p["b2"],
      p["ln2_g"], p["ln2_b"])


def layer_forward(x, lengths, p, n_heads, left_size, right_size, tq):
    B, T_pad, D = x.shape
    assert D % n_heads == 0
    left8 = _round_up(left_size, 8)
    # fixed band width: covers [q0-left, q0+tq-1+right], 128-aligned when possible
    band = min(T_pad, _round_up(tq + left8 + right_size, 128))
    buffered1 = _buffered1_ok()
    q, k, v = qkv_forward(x, p, tq, buffered1)
    return attn_ffn_forward(x, q, k, v, lengths, p, n_heads, left_size,
                            right_size, tq, band, buffered1)


# ---------------------------------------------------------------------------
# Plain-JAX glue matching the PyTorch forward
# ---------------------------------------------------------------------------
def calc_data_len(result_len, pad_len, data_len, kernel_size, stride):
    inp_len = data_len + pad_len
    convolved_pad_mask = (pad_len >= kernel_size).astype(jnp.int32)
    unconvolved = (inp_len - kernel_size) % stride
    undiscarded_pad_mask = (unconvolved < pad_len).astype(jnp.int32)
    convolved = pad_len - unconvolved
    new_pad_len = (convolved - kernel_size) // stride + 1
    new_pad_len = new_pad_len * convolved_pad_mask * undiscarded_pad_mask
    return (result_len - new_pad_len).astype(jnp.int32)


def transformer_transducer_encoder(x, mask, conv_w, conv_b, layer_params,
                                   n_heads, left_size, right_size,
                                   kernel_size=1, stride=1):
    B, T, F_in = x.shape
    lengths = mask.sum(axis=-1).astype(jnp.int32)

    # pre_net (Conv1d). k==1, s==1 is a pointwise linear: no im2col needed.
    if kernel_size == 1 and stride == 1:
        T_out = T
        patches = x
    else:
        # TODO(synk): fold the im2col gather into _prenet_kernel via strided
        # pl.ds reads instead of materialising kernel_size x-sized patches.
        T_out = (T - kernel_size) // stride + 1
        idx = jnp.arange(T_out)[:, None] * stride + jnp.arange(kernel_size)[None, :]
        patches = x[:, idx, :].reshape(B, T_out, kernel_size * F_in)
    patches = patches.astype(jnp.bfloat16)             # halve prenet HBM read
    out = prenet_forward(patches, conv_w, conv_b)       # (B, T_out, D) bf16

    lengths = calc_data_len(T_out, T - lengths, lengths, kernel_size, stride)

    # pad T to a whole number of query tiles; padded rows are masked by length
    tq = _pick_q_tile(T_out)
    T_pad = _round_up(T_out, tq)
    if T_pad > T_out:
        out = jnp.pad(out, ((0, 0), (0, T_pad - T_out), (0, 0)))

    for p in layer_params:
        out = layer_forward(out, lengths, p, n_heads, left_size, right_size, tq)

    out = out[:, :T_out, :].astype(jnp.float32)
    return out, lengths


def init_encoder_params(key, in_features, n_layers, d_model, ff_size, kernel_size):
    # Matmul weights stored bf16; biases / LayerNorm params stay f32.
    # The 1/d_model attention scale is folded into Wq (and bq) here.
    keys = jax.random.split(key, 2 + n_layers)
    fan_in_conv = kernel_size * in_features
    conv_w = (jax.random.normal(keys[0], (fan_in_conv, d_model), jnp.float32)
              / math.sqrt(fan_in_conv)).astype(jnp.bfloat16)
    conv_b = jax.random.normal(keys[1], (1, d_model), jnp.float32) * 0.01

    def dense(kk, shape, fan_in, scale=1.0):
        w = jax.random.normal(kk, shape, jnp.float32) / math.sqrt(fan_in)
        return (w * scale).astype(jnp.bfloat16)

    inv_d = 1.0 / float(d_model)
    layers = []
    for li in range(n_layers):
        k = jax.random.split(keys[2 + li], 6)
        layers.append(dict(
            ln1_g=jnp.ones((1, d_model), jnp.float32),
            ln1_b=jnp.zeros((1, d_model), jnp.float32),
            wq=dense(k[0], (d_model, d_model), d_model, scale=inv_d),
            bq=jnp.zeros((1, d_model), jnp.float32),     # pre-scaled (zero here)
            wk=dense(k[1], (d_model, d_model), d_model),
            bk=jnp.zeros((1, d_model), jnp.float32),
            wv=dense(k[2], (d_model, d_model), d_model),
            bv=jnp.zeros((1, d_model), jnp.float32),
            wo=dense(k[3], (d_model, d_model), d_model),
            bo=jnp.zeros((1, d_model), jnp.float32),
            w1=dense(k[4], (d_model, ff_size), d_model),
            b1=jnp.zeros((1, ff_size), jnp.float32),
            w2=dense(k[5], (ff_size, d_model), ff_size),
            b2=jnp.zeros((1, d_model), jnp.float32),
            ln2_g=jnp.ones((1, d_model), jnp.float32),
            ln2_b=jnp.zeros((1, d_model), jnp.float32),
        ))
    return conv_w, conv_b, layers


if __name__ == "__main__":
    # small shapes consistent with the module's forward
    B, T, in_features = 2, 16, 8
    d_model, ff_size, n_heads, n_layers = 32, 64, 4, 2
    left_size, right_size = 4, 2
    kernel_size, stride = 1, 1            # Conv1d defaults of the module

    key = jax.random.PRNGKey(0)
    kx, kp = jax.random.split(key)
    x = jax.random.normal(kx, (B, T, in_features), jnp.float32)
    true_lens = jnp.array([T, 11], dtype=jnp.int32)
    mask = jnp.arange(T)[None, :] < true_lens[:, None]        # (B, T) bool

    conv_w, conv_b, layer_params = init_encoder_params(
        kp, in_features, n_layers, d_model, ff_size, kernel_size)

    out, lengths = transformer_transducer_encoder(
        x, mask, conv_w, conv_b, layer_params,
        n_heads, left_size, right_size, kernel_size, stride)
    out, lengths = jax.block_until_ready((out, lengths))

    assert out.shape == (B, T, d_model) and out.dtype == jnp.float32
    assert lengths.shape == (B,)
    assert bool(jnp.all(jnp.isfinite(out)))
    # TODO(synk): dropout layers are identity (eval-mode); no Pallas equivalent needed.
    print("KERNEL_OK")
</pallas_src>

<mosaic_0001>
module attributes {stable_mosaic.version = 11 : i64} {
  func.func @_prenet_kernel(%arg0: i32, %arg1: memref<1x16x8xbf16, #tpu.memory_space<vmem>>, %arg2: memref<8x32xbf16, #tpu.memory_space<vmem>>, %arg3: memref<1x32xf32, #tpu.memory_space<vmem>>, %arg4: memref<1x16x32xbf16, #tpu.memory_space<vmem>>) attributes {dimension_semantics = [#tpu.dimension_semantics<parallel>], iteration_bounds = array<i64: 2>, scalar_prefetch = 0 : i64, scratch_operands = 0 : i64, tpu.core_type = #tpu.core_type<tc>, window_params = [{transform_indices = @transform_0, window_bounds = array<i64: 1, 16, 8>}, {pipeline_mode = #tpu.pipeline_mode<synchronous>, transform_indices = @transform_1, window_bounds = array<i64: 8, 32>}, {pipeline_mode = #tpu.pipeline_mode<synchronous>, transform_indices = @transform_2, window_bounds = array<i64: 1, 32>}, {transform_indices = @transform_3, window_bounds = array<i64: 1, 16, 32>}]} {
    %c0 = arith.constant 0 : index
    %c0_0 = arith.constant 0 : index
    %c0_1 = arith.constant 0 : index
    %0 = vector.load %arg1[%c0, %c0_0, %c0_1] : memref<1x16x8xbf16, #tpu.memory_space<vmem>>, vector<1x16x8xbf16>
    %1 = vector.shape_cast %0 : vector<1x16x8xbf16> to vector<16x8xbf16>
    %c0_2 = arith.constant 0 : index
    %c0_3 = arith.constant 0 : index
    %2 = vector.load %arg2[%c0_2, %c0_3] : memref<8x32xbf16, #tpu.memory_space<vmem>>, vector<8x32xbf16>
    %cst = arith.constant dense<0.000000e+00> : vector<16x32xf32>
    %3 = tpu.matmul %1, %2, %cst {dimension_numbers = #tpu.dot_dimension_numbers<[1], [0], [0], [1], [0, 0, 1, 1], [], []>} : vector<16x8xbf16>, vector<8x32xbf16>, vector<16x32xf32> -> vector<16x32xf32>
    %c0_4 = arith.constant 0 : index
    %c0_5 = arith.constant 0 : index
    %4 = vector.load %arg3[%c0_4, %c0_5] : memref<1x32xf32, #tpu.memory_space<vmem>>, vector<1x32xf32>
    %5 = vector.broadcast %4 : vector<1x32xf32> to vector<16x32xf32>
    %6 = arith.addf %3, %5 : vector<16x32xf32>
    %7 = arith.truncf %6 : vector<16x32xf32> to vector<16x32xbf16>
    %c0_6 = arith.constant 0 : index
    %c0_7 = arith.constant 0 : index
    %c0_8 = arith.constant 0 : index
    %8 = vector.load %arg4[%c0_6, %c0_7, %c0_8] : memref<1x16x32xbf16, #tpu.memory_space<vmem>>, vector<1x16x32xbf16>
    %9 = vector.shape_cast %8 : vector<1x16x32xbf16> to vector<16x32xbf16>
    %10 = vector.shape_cast %7 : vector<16x32xbf16> to vector<1x16x32xbf16>
    tpu.vector_store %arg4[%c0_6, %c0_7, %c0_8], %10 {strides = array<i32>} : memref<1x16x32xbf16, #tpu.memory_space<vmem>>, vector<1x16x32xbf16>,
    return
  }
  func.func @transform_0(%arg0: i32) -> (i32, i32, i32) {
    %c0_i32 = arith.constant 0 : i32
    %c0_i32_0 = arith.constant 0 : i32
    %c0_i32_1 = arith.constant 0 : i32
    return %arg0, %c0_i32, %c0_i32_0 : i32, i32, i32
  }
  func.func @transform_1(%arg0: i32) -> (i32, i32) {
    %c0_i32 = arith.constant 0 : i32
    %c0_i32_0 = arith.constant 0 : i32
    %c0_i32_1 = arith.constant 0 : i32
    return %c0_i32, %c0_i32_0 : i32, i32
  }
  func.func @transform_2(%arg0: i32) -> (i32, i32) {
    %c0_i32 = arith.constant 0 : i32
    %c0_i32_0 = arith.constant 0 : i32
    %c0_i32_1 = arith.constant 0 : i32
    return %c0_i32, %c0_i32_0 : i32, i32
  }
  func.func @transform_3(%arg0: i32) -> (i32, i32, i32) {
    %c0_i32 = arith.constant 0 : i32
    %c0_i32_0 = arith.constant 0 : i32
    %c0_i32_1 = arith.constant 0 : i32
    return %arg0, %c0_i32, %c0_i32_0 : i32, i32, i32
  }
}

</mosaic_0001>

<llo_original>
// kernel: tpu_custom_call.1
$region0: #{tpu_custom_call.1}
  #allocation0 [shape = 'u32[]', space=smem, size = 0x4, offset = 0x4, fixed_abs, tag = 'smem constant byte address 0x4 - core index']
  #allocation1 [shape = 'u32[72,128]{1,0:T(1,128)}', space=vmem, size = 0x9000, scoped, tag = 'internal scratch']
  %s0 = inlined_call_operand.vmem [shape: bf16[2,16,8], index: 0, kind: input, shape index: {}]
  %s1 = inlined_call_operand.vmem [shape: bf16[8,32], index: 1, kind: input, shape index: {}]
  %s2 = inlined_call_operand.vmem [shape: f32[1,32], index: 2, kind: input, shape index: {}]
  %s3 = inlined_call_operand.hbm [shape: bf16[2,16,32], index: 3, kind: output, shape index: {}]
  %s4 = sld [smem:[#allocation0]]
  $region45: #{tpu_custom_call.1} parent=0
    _
  %s6 = ssub.s32 1, %s4
  %s7 = scalar_select 0, %s6, %s4
  $region1: #{tpu_custom_call.1} parent=0
    #allocation2 [shape = 'u8[8192]{0}', space=vmem, size = 0x2000, scoped, tag = 'output window, operand 0']
    #allocation3 [shape = 's32[2]{0}', space=sflag, size = 0x8, scoped, tag = 'scoped memory for tpu_custom_call.1']
    %8 = vsyncpa [#allocation3], 0
    %s9 = scalar_lea.sflag [#allocation3], 1
    %10 = vsyncpa %s9, 0
    loop: start=0, step=1, limit=4
    $region2: #{tpu_custom_call.1} parent=1 // loop_pre_header
      _
    $region3: #{tpu_custom_call.1} parent=1 // loop_header
      %s12 = sphi 0, %s16
      %p13 = scmp.ge.s32.totalorder %s12, 4
      %s22 = sphi 0, %s24
      %s25 = sphi 0, %s22
      %s26 = sphi 0, %s25
      %s42 = sphi 0, %s26
      %s46 = sphi 0, %s46
      %s48 = sphi 0, %s46
      %s49 = sphi 0, %s48
      %s63 = sphi 0, %s49
      %s67 = sphi 0, %s67
      %s69 = sphi 0, %s67
      %s70 = sphi 0, %s69
      %s84 = sphi 0, %s70
      %s90 = sphi 0, %s92
      %s93 = sphi 0, %s90
      %s94 = sphi 0, %s93
      %s110 = sphi 0, %s94
    $region4: #{tpu_custom_call.1} parent=1 // loop_header_branch
      %15 = sbr.rel (%p13) target = $region8
    $region5: #{tpu_custom_call.1} parent=1 // loop_body
      %s17 = ssub.s32 %s12, 1
      %s18 = ssub.s32 %s12, 2
      %s19 = sadd.s32 %s12, 1
      %s20 = ssub.s32 %s12, %s19
      %p21 = scmp.eq.s32.totalorder %s20, 0
      %s23 = sadd.s32 %s22, 1
      %s24 = scalar_select %p21, %s22, %s23
      %p27 = pneg %p21
      %p28 = scmp.eq.s32.totalorder %s12, 1
      %p29 = por %p27, %p28
      %p30 = scmp.ne.s32.totalorder %s22, %s25
      %p31 = scmp.eq.s32.totalorder %s12, 0
      %p32 = por %p30, %p31
      %p33 = scmp.ne.s32.totalorder %s22, %s25
      %p34 = scmp.eq.s32.totalorder %s17, 1
      %p35 = por %p33, %p34
      %p36 = scmp.ne.s32.totalorder %s25, %s26
      %p37 = scmp.eq.s32.totalorder %s17, 0
      %p38 = por %p36, %p37
      %p39 = scmp.ne.s32.totalorder %s25, %s26
      %p40 = scmp.eq.s32.totalorder %s18, 1
      %p41 = por %p39, %p40
      %p43 = scmp.ne.s32.totalorder %s26, %s42
      %p44 = scmp.eq.s32.totalorder %s18, 0
      %p45 = por %p43, %p44
      %s47 = sadd.s32 %s46, 1
      %p50 = scmp.eq.s32.totalorder %s12, 1
      %p51 = scmp.ne.s32.totalorder %s46, %s48
      %p52 = scmp.eq.s32.totalorder %s12, 0
      %p53 = por %p51, %p52
      %p54 = scmp.ne.s32.totalorder %s46, %s48
      %p55 = scmp.eq.s32.totalorder %s17, 1
      %p56 = por %p54, %p55
      %p57 = scmp.ne.s32.totalorder %s48, %s49
      %p58 = scmp.eq.s32.totalorder %s17, 0
      %p59 = por %p57, %p58
      %p60 = scmp.ne.s32.totalorder %s48, %s49
      %p61 = scmp.eq.s32.totalorder %s18, 1
      %p62 = por %p60, %p61
      %p64 = scmp.ne.s32.totalorder %s49, %s63
      %p65 = scmp.eq.s32.totalorder %s18, 0
      %p66 = por %p64, %p65
      %s68 = sadd.s32 %s67, 1
      %p71 = scmp.eq.s32.totalorder %s12, 1
      %p72 = scmp.ne.s32.totalorder %s67, %s69
      %p73 = scmp.eq.s32.totalorder %s12, 0
      %p74 = por %p72, %p73
      %p75 = scmp.ne.s32.totalorder %s67, %s69
      %p76 = scmp.eq.s32.totalorder %s17, 1
      %p77 = por %p75, %p76
      %p78 = scmp.ne.s32.totalorder %s69, %s70
      %p79 = scmp.eq.s32.totalorder %s17, 0
      %p80 = por %p78, %p79
      %p81 = scmp.ne.s32.totalorder %s69, %s70
      %p82 = scmp.eq.s32.totalorder %s18, 1
      %p83 = por %p81, %p82
      %p85 = scmp.ne.s32.totalorder %s70, %s84
      %p86 = scmp.eq.s32.totalorder %s18, 0
      %p87 = por %p85, %p86
      %s88 = ssub.s32 %s12, %s19
      %p89 = scmp.eq.s32.totalorder %s88, 0
      %s91 = sadd.s32 %s90, 1
      %s92 = scalar_select %p89, %s90, %s91
      %p95 = pneg %p89
      %p96 = scmp.eq.s32.totalorder %s12, 1
      %p97 = por %p95, %p96
      %p98 = scmp.ne.s32.totalorder %s90, %s93
      %p99 = scmp.eq.s32.totalorder %s12, 0
      %p100 = por %p98, %p99
      %p101 = scmp.ne.s32.totalorder %s90, %s93
      %p102 = scmp.eq.s32.totalorder %s17, 1
      %p103 = por %p101, %p102
      %p104 = scmp.ne.s32.totalorder %s93, %s94
      %p105 = scmp.eq.s32.totalorder %s17, 0
      %p106 = por %p104, %p105
      %p107 = scmp.ne.s32.totalorder %s93, %s94
      %p108 = scmp.eq.s32.totalorder %s18, 1
      %p109 = por %p107, %p108
      %p111 = scmp.ne.s32.totalorder %s94, %s110
      %p112 = scmp.eq.s32.totalorder %s18, 0
      %p113 = por %p111, %p112
      %p114 = scmp.le.s32.totalorder 1, %s12
      %p115 = scmp.lt.s32.totalorder %s12, 3
      %p116 = pnand %p114, %p115
      %p117 = pneg %p116
      // Predicated region
      $region9: #{tpu_custom_call.1} parent=5 // pred_check
        _
      $region10: #{tpu_custom_call.1} parent=5 // pred_check_branch
        %119 = sbr.rel (%p116) target = $region12
      $region11: #{tpu_custom_call.1} parent=5 // pred_region
        %s120 = ssub.s32 %s12, 1
        // Predicated region
        $region13: #{tpu_custom_call.1} parent=11 // pred_check
          %p121 = pneg %p59
        $region14: #{tpu_custom_call.1} parent=11 // pred_check_branch
          %123 = sbr.rel (%p121) target = $region16
        $region15: #{tpu_custom_call.1} parent=11 // pred_region
          _
        $region16: #{tpu_custom_call.1} parent=11 // pred_fallthru
          _
        // Predicated region
        $region17: #{tpu_custom_call.1} parent=11 // pred_check
          %p124 = pneg %p80
        $region18: #{tpu_custom_call.1} parent=11 // pred_check_branch
          %126 = sbr.rel (%p124) target = $region20
        $region19: #{tpu_custom_call.1} parent=11 // pred_region
          _
        $region20: #{tpu_custom_call.1} parent=11 // pred_fallthru
          _
      $region12: #{tpu_custom_call.1} parent=5 // pred_fallthru
        _
      %p127 = scmp.lt.s32.totalorder %s12, 2
      // Predicated region
      $region21: #{tpu_custom_call.1} parent=5 // pred_check
        %p128 = pneg %p127
      $region22: #{tpu_custom_call.1} parent=5 // pred_check_branch
        %130 = sbr.rel (%p128) target = $region24
      $region23: #{tpu_custom_call.1} parent=5 // pred_region
        // Predicated region
        $region25: #{tpu_custom_call.1} parent=23 // pred_check
          %p131 = pneg %p32
        $region26: #{tpu_custom_call.1} parent=23 // pred_check_branch
          %133 = sbr.rel (%p131) target = $region28
        $region27: #{tpu_custom_call.1} parent=23 // pred_region
          %p134 = scmp.lt.s32.totalorder %s12, 1
          %s135 = scalar_select %p134, %s12, 1
          %s136 = smul.addr %s135, 2
          %s137 = smul.addr %s136, 4
          %s138 = scalar_lea.vmem %s0, %s137
        $region28: #{tpu_custom_call.1} parent=23 // pred_fallthru
          _
      $region24: #{tpu_custom_call.1} parent=5 // pred_fallthru
        _
      %p139 = scmp.le.s32.totalorder 1, %s12
      %p140 = scmp.lt.s32.totalorder %s12, 3
      %p141 = pnand %p139, %p140
      %p142 = pneg %p141
      // Predicated region
      $region29: #{tpu_custom_call.1} parent=5 // pred_check
        _
      $region30: #{tpu_custom_call.1} parent=5 // pred_check_branch
        %144 = sbr.rel (%p141) target = $region32
      $region31: #{tpu_custom_call.1} parent=5 // pred_region
        %s145 = ssub.s32 %s12, 1
        %p146 = scmp.lt.s32.totalorder %s17, 1
        %s147 = scalar_select %p146, %s17, 1
        %s148 = smul.addr %s147, 2
        %s149 = smul.addr %s148, 4
        %s150 = scalar_lea.vmem %s0, %s149
        %p151 = pneg %p38
        %p152 = pneg %p35
        %p153 = pneg %p59
        %p154 = pneg %p56
        %p155 = pneg %p80
        %p156 = pneg %p77
        %p157 = pneg %p106
        %p158 = pneg %p103
        %s159 = sand.u32 %s93, 1
        %s160 = scalar_lea.sflag [#allocation3], %s159
        %s161 = sand.u32 %s93, 1
        %s162 = smul.addr %s161, 8
        %s163 = scalar_lea.vmem [#allocation2], %s162
        %p164 = scmp.lt.s32.totalorder %s17, 1
        %s165 = scalar_select %p164, %s17, 1
        %s166 = smul.addr %s165, 2
        %s167 = smul.addr %s166, 4
        %s168 = scalar_lea.vmem %s0, %s167
        %v170 = vld [vmem:[%s168] sm:$0xf]
        %v171 = vld [vmem:[%s168 + $0x4] sm:$0xf]
        %v172 = vld [vmem:[%s1] sm:$0xf]
        %v173 = vld [vmem:[%s2] sm:$0x1]
        %v175 = vperm.slane %v173, 0
        %v179 = vunpack.c.l.b16 %v170
        %v180 = vunpack.c.l.b16 %v171
        %v181 = vpack.c.b16 %v180, %v179
        %vm182 = vcmask 64512
        %v184 = vsel %vm182, %v181, 0
        %vm186 = vcmask 1043456
        %v188 = vsel %vm186, %v172, 0
        %190 = vmatpush.bf16.msra.mxu0 0
        %191 = vmatpush.bf16.msra.mxu0 0
        %192 = vmatpush.bf16.msra.mxu0 0
        %193 = vmatpush.bf16.msra.mxu0 0
        %194 = vmatpush.bf16.msra.mxu0 0
        %195 = vmatpush.bf16.msra.mxu0 0
        %196 = vmatpush.bf16.msra.mxu0 0
        %197 = vmatpush.bf16.msra.mxu0 %v188
        %198 = vmatmul.bf16.gmra.mxu0 %v184
        %v199 = vpop.f32.mrf.mxu0
        %v200 = vadd.f32 %v175, %v199
        %v201 = vpop.f32.mrf.mxu0
        %v202 = vadd.f32 %v175, %v201
        %203 = vdwg.mxu0
        %v204 = vpack.c.bf16 %v200, %v200
        %v205 = vpack.c.bf16 %v202, %v202
        %vm206 = vcmask 257024
        %207 = vst.msk [vmem:[%s163] sm:$0xf] %vm206, %v204
        %208 = vst.msk [vmem:[%s163 + $0x4] sm:$0xf] %vm206, %v205
        %s209 = sand.u32 %s93, 1
        %s210 = scalar_lea.sflag [#allocation3], %s209
        %s211 = sand.u32 %s93, 1
        %s212 = smul.addr %s211, 8
        %s213 = scalar_lea.vmem [#allocation2], %s212
        // Predicated region
        $region33: #{tpu_custom_call.1} parent=31 // pred_check
          %p214 = pneg %p103
        $region34: #{tpu_custom_call.1} parent=31 // pred_check_branch
          %216 = sbr.rel (%p214) target = $region36
        $region35: #{tpu_custom_call.1} parent=31 // pred_region
          %218 = vsyncadd %s210, 0
          %s219 = smul.addr %s17, 2
          %s220 = smul.addr %s219, 4
          %s221 = scalar_lea.hbm %s3, %s220
          %s222 = sshll.u32 %s213, 4
          %s223 = int_to_ptr.vmem [resolvable:$true] %s222
          %s224 = sshll.u32 %s221, 4
          %s225 = int_to_ptr.hbm [resolvable:$true] %s224
          %230 = dma.vmem_to_hbm [thread:$0]  %s223, 128, %s225, %s210, 64, 64, 4
        $region36: #{tpu_custom_call.1} parent=31 // pred_fallthru
          _
      $region32: #{tpu_custom_call.1} parent=5 // pred_fallthru
        _
      %p231 = scmp.le.s32.totalorder 2, %s12
      // Predicated region
      $region37: #{tpu_custom_call.1} parent=5 // pred_check
        %p232 = pneg %p231
      $region38: #{tpu_custom_call.1} parent=5 // pred_check_branch
        %234 = sbr.rel (%p232) target = $region40
      $region39: #{tpu_custom_call.1} parent=5 // pred_region
        %s235 = ssub.s32 %s12, 2
        // Predicated region
        $region41: #{tpu_custom_call.1} parent=39 // pred_check
          %p236 = pneg %p109
        $region42: #{tpu_custom_call.1} parent=39 // pred_check_branch
          %238 = sbr.rel (%p236) target = $region44
        $region43: #{tpu_custom_call.1} parent=39 // pred_region
          %s239 = sand.u32 %s94, 1
          %s240 = scalar_lea.sflag [#allocation3], %s239
          %s241 = sand.u32 %s94, 1
          %s242 = smul.addr %s241, 8
          %s243 = scalar_lea.vmem [#allocation2], %s242
          %245 = dma.done %s240, 128
        $region44: #{tpu_custom_call.1} parent=39 // pred_fallthru
          _
      $region40: #{tpu_custom_call.1} parent=5 // pred_fallthru
        _
    $region6: #{tpu_custom_call.1} parent=1 // loop_footer
      %s16 = sadd.s32 1, %s12
    $region7: #{tpu_custom_call.1} parent=1 // loop_footer_branch
      %11 = sbr.rel target = $region3
    $region8: #{tpu_custom_call.1} parent=1 // loop_exit
      _
    %246 = vsyncpa [#allocation3], 1
    %s247 = scalar_lea.sflag [#allocation3], 1
    %248 = vsyncpa %s247, 1

</llo_original>
